<compile_context>
chip_gen: v5e
topology: v5e:2x2
jax: 0.10.0
libtpu: 0.0.40
codegen_flags: <defaults>
</compile_context>

<pallas_src>
from functools import reduce
import operator

import jax
import jax.numpy as jnp
from jax.experimental import pallas as pl
from jax.experimental.pallas import tpu as pltpu


def _round_up(a: int, b: int) -> int:
    return ((a + b - 1) // b) * b


def _drop_path_kernel(scale_ref, x_ref, o_ref):
    """out[n, :] = x[n, :] * scale[n]  (native dtype, lane-dense tile)."""
    # scale_ref: (N, 1) resident tile; x_ref / o_ref: (N, T) lane-dense tiles.
    o_ref[...] = x_ref[...] * scale_ref[...]


def drop_path(x, drop_prob, key, *, training=True):
    """Stochastic depth per sample. x: (N, ...) with leading batch dim."""
    if drop_prob is None or float(drop_prob) == 0.0 or not training:
        return x

    keep_prob = 1.0 - float(drop_prob)
    if keep_prob <= 0.0:
        # drop_prob == 1.0: every sample dropped (avoid 0 * inf = NaN).
        return jnp.zeros_like(x)

    N = x.shape[0]
    feat_dims = x.shape[1:]
    F = reduce(operator.mul, feat_dims, 1)

    # Per-sample scale precomputed host-side: 0 or 1/keep_prob, in x.dtype so
    # the kernel is a single native-dtype multiply (no f32 widen on v6e/v7x).
    keep = jax.random.bernoulli(key, p=keep_prob, shape=(N,))
    scale = (keep.astype(jnp.float32) * (1.0 / keep_prob)).astype(x.dtype)
    scale = scale.reshape(N, 1)

    # Lane-dense flatten: (N, F). Tile the feature axis into chunks of T
    # columns (T a multiple of 128), capped so one (N, T) tile is ~2 MiB
    # (fits comfortably with double buffering inside v7x's smaller VMEM).
    x2 = x.reshape(N, F)
    itemsize = jnp.dtype(x.dtype).itemsize
    LANE = 128
    target_tile_bytes = 2 * 1024 * 1024
    t_cap = max(LANE, (target_tile_bytes // max(1, N * itemsize)) // LANE * LANE)
    T = min(t_cap, _round_up(F, LANE))

    # Pad so the grid covers the array exactly (no partial blocks).
    Fp = _round_up(F, T)
    if Fp != F:
        x2 = jnp.pad(x2, ((0, 0), (0, Fp - F)))
    num_chunks = Fp // T

    out2 = pl.pallas_call(
        _drop_path_kernel,
        out_shape=jax.ShapeDtypeStruct((N, Fp), x.dtype),
        grid=(num_chunks,),
        in_specs=[
            # Per-sample scale: tiny, same block every step -> stays resident.
            pl.BlockSpec((N, 1), lambda j: (0, 0)),
            # Data: full batch rows, lane-dense chunk of the feature axis.
            pl.BlockSpec((N, T), lambda j: (0, j)),
        ],
        out_specs=pl.BlockSpec((N, T), lambda j: (0, j)),
        compiler_params=pltpu.CompilerParams(
            # Feature chunks are fully independent -> parallel (dual-TC on v7x).
            dimension_semantics=("parallel",),
            vmem_limit_bytes=32 * 1024 * 1024,
        ),
    )(scale, x2)

    if Fp != F:
        out2 = out2[:, :F]
    return out2.reshape(x.shape)


class DropPath:
    """JAX/Pallas port of the PyTorch DropPath module."""

    def __init__(self, drop_prob=None):
        self.drop_prob = drop_prob

    def __call__(self, x, key, training=True):
        return drop_path(x, self.drop_prob, key, training=training)

    def extra_repr(self) -> str:
        return "p={}".format(self.drop_prob)


if __name__ == "__main__":
    root = jax.random.PRNGKey(0)
    k_x, k_drop, k_x2 = jax.random.split(root, 3)

    # Small NCHW shapes consistent with a residual-block main path.
    N, C, H, W = 2, 4, 16, 16
    x = jax.random.normal(k_x, (N, C, H, W), dtype=jnp.float32)

    drop_prob = 0.3
    module = DropPath(drop_prob=drop_prob)

    out = module(x, k_drop, training=True)
    out = jax.block_until_ready(out)

    # Pure-JAX reference with the identical mask draw and identical scale math.
    keep_prob = 1.0 - drop_prob
    keep = jax.random.bernoulli(k_drop, p=keep_prob, shape=(N,))
    ref_scale = (keep.astype(jnp.float32) * (1.0 / keep_prob)).astype(x.dtype)
    ref = x * ref_scale[:, None, None, None]

    assert out.shape == x.shape and out.dtype == x.dtype
    assert jnp.allclose(out, ref, atol=1e-6, rtol=1e-6)

    # Non-128-aligned feature size exercises the padding path.
    x_odd = jax.random.normal(k_x2, (2, 3, 7, 5), dtype=jnp.float32)
    out_odd = jax.block_until_ready(module(x_odd, k_drop, training=True))
    ref_odd = x_odd * ref_scale[:, None, None, None]
    assert out_odd.shape == x_odd.shape
    assert jnp.allclose(out_odd, ref_odd, atol=1e-6, rtol=1e-6)

    # Identity paths (drop_prob=0 / eval mode) must be exact passthrough.
    ident = DropPath(drop_prob=0.0)(x, k_drop, training=True)
    assert jnp.array_equal(ident, x)
    ident_eval = module(x, k_drop, training=False)
    assert jnp.array_equal(ident_eval, x)

    # drop_prob == 1.0 edge case: all samples dropped, no NaNs.
    all_drop = DropPath(drop_prob=1.0)(x, k_drop, training=True)
    assert jnp.array_equal(all_drop, jnp.zeros_like(x))

    print("KERNEL_OK")
</pallas_src>

<mosaic_0001>
module attributes {stable_mosaic.version = 11 : i64} {
  func.func @_drop_path_kernel(%arg0: i32, %arg1: memref<2x1xf32, #tpu.memory_space<vmem>>, %arg2: memref<2x1024xf32, #tpu.memory_space<vmem>>, %arg3: memref<2x1024xf32, #tpu.memory_space<vmem>>) attributes {dimension_semantics = [#tpu.dimension_semantics<parallel>], iteration_bounds = array<i64: 1>, scalar_prefetch = 0 : i64, scratch_operands = 0 : i64, tpu.core_type = #tpu.core_type<tc>, window_params = [{pipeline_mode = #tpu.pipeline_mode<synchronous>, transform_indices = @transform_0, window_bounds = array<i64: 2, 1>}, {transform_indices = @transform_1, window_bounds = array<i64: 2, 1024>}, {transform_indices = @transform_2, window_bounds = array<i64: 2, 1024>}]} {
    %c0 = arith.constant 0 : index
    %c0_0 = arith.constant 0 : index
    %0 = vector.load %arg2[%c0, %c0_0] : memref<2x1024xf32, #tpu.memory_space<vmem>>, vector<2x1024xf32>
    %c0_1 = arith.constant 0 : index
    %c0_2 = arith.constant 0 : index
    %1 = vector.load %arg1[%c0_1, %c0_2] : memref<2x1xf32, #tpu.memory_space<vmem>>, vector<2x1xf32>
    %2 = vector.broadcast %1 : vector<2x1xf32> to vector<2x1024xf32>
    %3 = arith.mulf %0, %2 : vector<2x1024xf32>
    %c0_3 = arith.constant 0 : index
    %c0_4 = arith.constant 0 : index
    %4 = vector.load %arg3[%c0_3, %c0_4] : memref<2x1024xf32, #tpu.memory_space<vmem>>, vector<2x1024xf32>
    tpu.vector_store %arg3[%c0_3, %c0_4], %3 {strides = array<i32>} : memref<2x1024xf32, #tpu.memory_space<vmem>>, vector<2x1024xf32>,
    return
  }
  func.func @transform_0(%arg0: i32) -> (i32, i32) {
    %c0_i32 = arith.constant 0 : i32
    %c0_i32_0 = arith.constant 0 : i32
    %c0_i32_1 = arith.constant 0 : i32
    return %c0_i32, %c0_i32_0 : i32, i32
  }
  func.func @transform_1(%arg0: i32) -> (i32, i32) {
    %c0_i32 = arith.constant 0 : i32
    %c0_i32_0 = arith.constant 0 : i32
    return %c0_i32, %arg0 : i32, i32
  }
  func.func @transform_2(%arg0: i32) -> (i32, i32) {
    %c0_i32 = arith.constant 0 : i32
    %c0_i32_0 = arith.constant 0 : i32
    return %c0_i32, %arg0 : i32, i32
  }
}

</mosaic_0001>

<llo_original>
// kernel: tpu_custom_call.1
$region0: #{tpu_custom_call.1}
  #allocation0 [shape = 'u32[]', space=smem, size = 0x4, offset = 0x4, fixed_abs, tag = 'smem constant byte address 0x4 - core index']
  #allocation1 [shape = 'u32[72,128]{1,0:T(1,128)}', space=vmem, size = 0x9000, scoped, tag = 'internal scratch']
  %s0 = inlined_call_operand.vmem [shape: f32[2,1], index: 0, kind: input, shape index: {}]
  %s1 = inlined_call_operand.hbm [shape: f32[2,1024], index: 1, kind: input, shape index: {}]
  %s2 = inlined_call_operand.hbm [shape: f32[2,1024], index: 2, kind: output, shape index: {}]
  %s3 = sld [smem:[#allocation0]]
  $region22: #{tpu_custom_call.1} parent=0
    _
  %s5 = ssub.s32 1, %s3
  %s6 = scalar_select 0, %s5, %s3
  $region1: #{tpu_custom_call.1} parent=0
    #allocation2 [shape = 'u8[8192]{0}', space=vmem, size = 0x2000, scoped, tag = 'input window, operand 1, single buffered']
    #allocation3 [shape = 's32[1]{0}', space=sflag, size = 0x4, scoped, tag = 'scoped memory for tpu_custom_call.1']
    #allocation4 [shape = 's32[1]{0}', space=sflag, size = 0x4, scoped, tag = 'scoped memory for tpu_custom_call.1']
    #allocation5 [shape = 'u8[8192]{0}', space=vmem, size = 0x2000, scoped, tag = 'output window, operand 0, single buffered']
    %7 = vsyncpa [#allocation3], 0
    %8 = vsyncpa [#allocation4], 0
    // Predicated region
    $region2: #{tpu_custom_call.1} parent=1 // pred_check
      _
    $region3: #{tpu_custom_call.1} parent=1 // pred_check_branch
      %10 = sbr.rel (0) target = $region5
    $region4: #{tpu_custom_call.1} parent=1 // pred_region
      _
    $region5: #{tpu_custom_call.1} parent=1 // pred_fallthru
      _
    // Predicated region
    $region6: #{tpu_custom_call.1} parent=1 // pred_check
      _
    $region7: #{tpu_custom_call.1} parent=1 // pred_check_branch
      %12 = sbr.rel (0) target = $region9
    $region8: #{tpu_custom_call.1} parent=1 // pred_region
      %14 = vsyncadd [#allocation3], 0
      %s16 = sshll.u32 %s1, 4
      %s17 = int_to_ptr.hbm [resolvable:$true] %s16
      %s18 = sshll.u32 [#allocation2], 4
      %s19 = int_to_ptr.vmem [resolvable:$true] %s18
      %21 = dma.hbm_to_vmem [thread:$0]  %s17, 256, %s19, [#allocation3]
    $region9: #{tpu_custom_call.1} parent=1 // pred_fallthru
      _
    // Predicated region
    $region10: #{tpu_custom_call.1} parent=1 // pred_check
      _
    $region11: #{tpu_custom_call.1} parent=1 // pred_check_branch
      %23 = sbr.rel (0) target = $region13
    $region12: #{tpu_custom_call.1} parent=1 // pred_region
      %25 = dma.done [#allocation3], 256
    $region13: #{tpu_custom_call.1} parent=1 // pred_fallthru
      _
    %v26 = vld [vmem:[#allocation2] sm:$0xff]
    %v27 = vld [vmem:[#allocation2 + $0x8] sm:$0xff]
    %v28 = vld [vmem:[%s0] sm:$0x3]
    %30 = vset.pattern.permute.xlu0 0
    %31 = vperm.xlu0 %30, %v28
    %v32 = vpop.permute.xlu0 %31
    %v34 = vunpack.c.l.s4 269488144
    %v35 = vunpack.c.0.s8 %v34
    %v36 = vperm.slane %v32, %v35
    %v38 = vmul.f32 %v26, %v36
    %v39 = vmul.f32 %v27, %v36
    %40 = vst [vmem:[#allocation5] sm:$0xff] %v38
    %41 = vst [vmem:[#allocation5 + $0x8] sm:$0xff] %v39
    // Predicated region
    $region14: #{tpu_custom_call.1} parent=1 // pred_check
      _
    $region15: #{tpu_custom_call.1} parent=1 // pred_check_branch
      %43 = sbr.rel (0) target = $region17
    $region16: #{tpu_custom_call.1} parent=1 // pred_region
      %45 = vsyncadd [#allocation4], 0
      %s47 = sshll.u32 [#allocation5], 4
      %s48 = int_to_ptr.vmem [resolvable:$true] %s47
      %s49 = sshll.u32 %s2, 4
      %s50 = int_to_ptr.hbm [resolvable:$true] %s49
      %52 = dma.vmem_to_hbm [thread:$0]  %s48, 256, %s50, [#allocation4]
    $region17: #{tpu_custom_call.1} parent=1 // pred_fallthru
      _
    // Predicated region
    $region18: #{tpu_custom_call.1} parent=1 // pred_check
      _
    $region19: #{tpu_custom_call.1} parent=1 // pred_check_branch
      %54 = sbr.rel (0) target = $region21
    $region20: #{tpu_custom_call.1} parent=1 // pred_region
      %56 = dma.done [#allocation4], 256
    $region21: #{tpu_custom_call.1} parent=1 // pred_fallthru
      _
    %57 = vsyncpa [#allocation3], 1
    %58 = vsyncpa [#allocation4], 1

</llo_original>
